<compile_context>
chip_gen: v7x
topology: tpu7x:2x2x1
jax: 0.10.0
libtpu: 0.0.40
codegen_flags: <defaults>
</compile_context>

<pallas_src>
import jax
import jax.numpy as jnp
from jax.experimental import pallas as pl
from jax.experimental.pallas import tpu as pltpu


def _round_up(x, m):
    return (x + m - 1) // m * m


# ---------------------------------------------------------------------------
# Kernel 1: fused multi-branch / multi-tap GEMM   Y[b] = Wall @ xflat[b]
#           (Wall VMEM-resident, no K grid axis, bf16 output)
# ---------------------------------------------------------------------------

def _fused_gemm_kernel(w_ref, x_ref, y_ref):
    y_ref[0] = jnp.dot(
        w_ref[...], x_ref[0], preferred_element_type=jnp.float32
    ).astype(y_ref.dtype)


def fused_tap_matmul(Wall, xflat, *, nt=512):
    """Wall: (M, K) bf16, xflat: (bs, K, Np) bf16 -> Y: (bs, M, Np) bf16."""
    M, K = Wall.shape
    bs, K2, Np = xflat.shape
    assert K == K2

    # Lane tile: 512 when the flat spatial dim allows it; otherwise use the full dim
    # (block == full dim is always a legal BlockSpec). Boundary N blocks (Np % Nt != 0)
    # are handled by Pallas (padded reads / masked writes on discarded columns only).
    Nt = Np if Np <= nt else nt
    grid = (bs, pl.cdiv(Np, Nt))

    # Explicit VMEM budget: resident Wall + double-buffered x tile + double-buffered
    # out tile (all bf16), plus slack.  Stays well under v7x's 64 MiB at production
    # shapes (C_in=2048, Nt=512  ->  ~14 MB need, ~28 MB request).
    need = 2 * (M * K + K * Nt + M * Nt) * 2 + (1 << 20)
    vmem_limit = int(min(max(2 * need, 8 << 20), 56 << 20))

    return pl.pallas_call(
        _fused_gemm_kernel,
        out_shape=jax.ShapeDtypeStruct((bs, M, Np), jnp.bfloat16),
        grid=grid,
        in_specs=[
            # Constant block index -> weights fetched once, stay resident in VMEM.
            pl.BlockSpec((M, K), lambda b, n: (0, 0)),
            pl.BlockSpec((1, K, Nt), lambda b, n: (b, 0, n)),
        ],
        out_specs=pl.BlockSpec((1, M, Nt), lambda b, n: (b, 0, n)),
        compiler_params=pltpu.CompilerParams(
            dimension_semantics=("parallel", "parallel"),
            vmem_limit_bytes=vmem_limit),
    )(Wall, xflat)


# ---------------------------------------------------------------------------
# Kernel 2: stream one (branch, tap) group of Y at a time from HBM (manual
#           double-buffered DMA), apply the static spatial shift, sum over all
#           tap groups and add the (pre-summed) bias.
# ---------------------------------------------------------------------------

def _make_tap_sum_kernel(shifts, ncls_pad, h_out, w_out):
    n_tap = len(shifts)

    def kernel(bias_ref, y_hbm, o_ref, ybuf, sem):
        b = pl.program_id(0)

        def start(g, slot):
            dy, _ = shifts[g]
            # Rows of one tap group, dy-cropped output rows, full width (minor dim is
            # contiguous -> large DMA chunks); the dx crop is a cheap in-VMEM slice.
            pltpu.make_async_copy(
                y_hbm.at[b, g * ncls_pad:(g + 1) * ncls_pad, dy:dy + h_out, :],
                ybuf.at[slot], sem.at[slot]).start()

        start(0, 0)
        o_ref[0] = jnp.zeros((ncls_pad, h_out, w_out), jnp.float32)

        for g, (dy, dx) in enumerate(shifts):          # static taps, unrolled
            slot = g & 1
            pltpu.make_async_copy(
                y_hbm.at[b, 0:ncls_pad, 0:h_out, :],
                ybuf.at[slot], sem.at[slot]).wait()
            if g + 1 < n_tap:
                start(g + 1, 1 - slot)                 # prefetch next tap group
            o_ref[0] += ybuf[slot, :, :, dx:dx + w_out].astype(jnp.float32)

        o_ref[0] += bias_ref[...]                      # (ncls_pad, 1, 1) broadcasts

    return kernel


def tap_shift_sum(Y4, bias_sum, shifts, ncls_pad, h_out, w_out):
    """Y4: (bs, M, Hp, Wp) bf16 in HBM, bias_sum: (ncls_pad, 1, 1) f32
       -> (bs, ncls_pad, h_out, w_out) f32."""
    bs, M, Hp, Wp = Y4.shape
    kernel = _make_tap_sum_kernel(tuple(shifts), ncls_pad, h_out, w_out)
    return pl.pallas_call(
        kernel,
        out_shape=jax.ShapeDtypeStruct((bs, ncls_pad, h_out, w_out), jnp.float32),
        grid=(bs,),
        in_specs=[
            pl.BlockSpec((ncls_pad, 1, 1), lambda b: (0, 0, 0)),
            pl.BlockSpec(memory_space=pl.ANY),         # Y stays in HBM, DMA'd per tap
        ],
        out_specs=pl.BlockSpec((1, ncls_pad, h_out, w_out), lambda b: (b, 0, 0, 0)),
        scratch_shapes=[
            pltpu.VMEM((2, ncls_pad, h_out, Wp), jnp.bfloat16),   # double buffer
            pltpu.SemaphoreType.DMA((2,)),
        ],
        compiler_params=pltpu.CompilerParams(
            dimension_semantics=("parallel",)),
    )(bias_sum, Y4)


# ---------------------------------------------------------------------------
# Forward pass (JAX glue around the two Pallas kernels)
# ---------------------------------------------------------------------------

def classifier_module_forward(x, params, *, nt=512):
    branches = params["branches"]
    bs, c_in, H, W = x.shape
    ncls = branches[0]["w"].shape[0]
    nbr = len(branches)
    ncls_pad = _round_up(ncls, 8)          # sublane-aligned tap groups

    # All branch outputs must share a spatial size (torch sums them in place).
    h_out = H + 2 * branches[0]["padding"] - 2 * branches[0]["dilation"]
    w_out = W + 2 * branches[0]["padding"] - 2 * branches[0]["dilation"]
    for br in branches:
        assert H + 2 * br["padding"] - 2 * br["dilation"] == h_out
        assert W + 2 * br["padding"] - 2 * br["dilation"] == w_out

    pad_max = max(br["padding"] for br in branches)
    Hp, Wp = H + 2 * pad_max, W + 2 * pad_max
    Np = Hp * Wp
    K_pad = _round_up(c_in, 128)           # lane-aligned contraction dim

    # Single shared zero-padded copy of x (no im2col), flattened spatially, bf16.
    xpad = jnp.pad(x, ((0, 0), (0, 0), (pad_max, pad_max), (pad_max, pad_max)))
    xflat = xpad.reshape(bs, c_in, Np).astype(jnp.bfloat16)
    if K_pad != c_in:
        xflat = jnp.pad(xflat, ((0, 0), (0, K_pad - c_in), (0, 0)))

    # Stack every (branch, tap) 1x1 weight slice; rows ordered [branch][ky][kx][class],
    # classes zero-padded to ncls_pad so each tap group starts on a sublane boundary.
    w_rows, shifts = [], []
    for br in branches:
        d, p = br["dilation"], br["padding"]
        w_p = jnp.pad(br["w"], ((0, ncls_pad - ncls), (0, 0), (0, 0), (0, 0)))
        w_rows.append(jnp.transpose(w_p, (2, 3, 0, 1)).reshape(9 * ncls_pad, c_in))
        for ky in range(3):
            for kx in range(3):
                shifts.append((ky * d + pad_max - p, kx * d + pad_max - p))
    Wall = jnp.concatenate(w_rows, axis=0).astype(jnp.bfloat16)   # (nbr*9*ncls_pad, C_in)
    if K_pad != c_in:
        Wall = jnp.pad(Wall, ((0, 0), (0, K_pad - c_in)))
    bias_sum = sum(br["b"] for br in branches).astype(jnp.float32)
    bias_sum = jnp.pad(bias_sum, (0, ncls_pad - ncls)).reshape(ncls_pad, 1, 1)

    M = nbr * 9 * ncls_pad

    # Heavy stage: one fused GEMM over all branches/taps (resident weights, bf16 out).
    Y = fused_tap_matmul(Wall, xflat, nt=nt)          # (bs, M, Np) bf16
    Y4 = Y.reshape(bs, M, Hp, Wp)                     # pure dim-split: no copy (Np == Hp*Wp)

    # Cheap stage: per-tap shift/crop on the ncls_pad-row result + branch sum + bias.
    out = tap_shift_sum(Y4, bias_sum, shifts, ncls_pad, h_out, w_out)
    return out[:, :ncls]                              # drop zero padding classes


# Pure-JAX reference (sanity check against the Pallas path).
def reference_forward(x, params):
    out = None
    for br in params["branches"]:
        p, d = br["padding"], br["dilation"]
        o = jax.lax.conv_general_dilated(
            x, br["w"], (1, 1), ((p, p), (p, p)), rhs_dilation=(d, d),
            dimension_numbers=("NCHW", "OIHW", "NCHW"))
        o = o + br["b"].reshape(1, -1, 1, 1)
        out = o if out is None else out + o
    return out


# ---------------------------------------------------------------------------
# Main
# ---------------------------------------------------------------------------

if __name__ == "__main__":
    # Small synthetic shapes standing in for the module's 2048 input channels.
    bs, c_in, ncls = 2, 256, 4
    H = W = 8
    dilation_series = [1, 2]
    padding_series = [1, 2]

    keys = iter(jax.random.split(jax.random.PRNGKey(0), 8))
    branches = []
    for d, p in zip(dilation_series, padding_series):
        branches.append(dict(
            dilation=d, padding=p,
            # Conv2d(c_in, ncls, 3, padding=p, dilation=d, bias=True), weight ~ N(0, 0.01)
            w=(0.01 * jax.random.normal(next(keys), (ncls, c_in, 3, 3))).astype(jnp.float32),
            b=(0.01 * jax.random.normal(next(keys), (ncls,))).astype(jnp.float32),
        ))
    params = dict(branches=branches)

    x = jax.random.normal(next(keys), (bs, c_in, H, W), dtype=jnp.float32)

    out = classifier_module_forward(x, params)
    jax.block_until_ready(out)

    ref = reference_forward(x, params)
    assert out.shape == ref.shape == (bs, ncls, H, W)
    # bf16 MXU operands + bf16 intermediate with f32 accumulation -> loose tolerance.
    assert jnp.allclose(out, ref, rtol=3e-2, atol=3e-2), \
        float(jnp.max(jnp.abs(out - ref)))
    print("KERNEL_OK")
</pallas_src>

<mosaic_0001>
module attributes {stable_mosaic.version = 11 : i64} {
  func.func @_fused_gemm_kernel(%arg0: i32, %arg1: i32, %arg2: memref<144x256xbf16, #tpu.memory_space<vmem>>, %arg3: memref<1x256x144xbf16, #tpu.memory_space<vmem>>, %arg4: memref<1x144x144xbf16, #tpu.memory_space<vmem>>) attributes {dimension_semantics = [#tpu.dimension_semantics<parallel>, #tpu.dimension_semantics<parallel>], iteration_bounds = array<i64: 2, 1>, scalar_prefetch = 0 : i64, scratch_operands = 0 : i64, tpu.core_type = #tpu.core_type<tc>, window_params = [{pipeline_mode = #tpu.pipeline_mode<synchronous>, transform_indices = @transform_0, window_bounds = array<i64: 144, 256>}, {transform_indices = @transform_1, window_bounds = array<i64: 1, 256, 144>}, {transform_indices = @transform_2, window_bounds = array<i64: 1, 144, 144>}]} {
    %c0 = arith.constant 0 : index
    %c0_0 = arith.constant 0 : index
    %0 = vector.load %arg2[%c0, %c0_0] : memref<144x256xbf16, #tpu.memory_space<vmem>>, vector<144x256xbf16>
    %c0_1 = arith.constant 0 : index
    %c0_2 = arith.constant 0 : index
    %c0_3 = arith.constant 0 : index
    %1 = vector.load %arg3[%c0_1, %c0_2, %c0_3] : memref<1x256x144xbf16, #tpu.memory_space<vmem>>, vector<1x256x144xbf16>
    %2 = vector.shape_cast %1 : vector<1x256x144xbf16> to vector<256x144xbf16>
    %cst = arith.constant dense<0.000000e+00> : vector<144x144xf32>
    %3 = tpu.matmul %0, %2, %cst {dimension_numbers = #tpu.dot_dimension_numbers<[1], [0], [0], [1], [0, 0, 1, 1], [], []>} : vector<144x256xbf16>, vector<256x144xbf16>, vector<144x144xf32> -> vector<144x144xf32>
    %4 = arith.truncf %3 : vector<144x144xf32> to vector<144x144xbf16>
    %c0_4 = arith.constant 0 : index
    %c0_5 = arith.constant 0 : index
    %c0_6 = arith.constant 0 : index
    %5 = vector.load %arg4[%c0_4, %c0_5, %c0_6] : memref<1x144x144xbf16, #tpu.memory_space<vmem>>, vector<1x144x144xbf16>
    %6 = vector.shape_cast %5 : vector<1x144x144xbf16> to vector<144x144xbf16>
    %7 = vector.shape_cast %4 : vector<144x144xbf16> to vector<1x144x144xbf16>
    tpu.vector_store %arg4[%c0_4, %c0_5, %c0_6], %7 {strides = array<i32>} : memref<1x144x144xbf16, #tpu.memory_space<vmem>>, vector<1x144x144xbf16>,
    return
  }
  func.func @transform_0(%arg0: i32, %arg1: i32) -> (i32, i32) {
    %c0_i32 = arith.constant 0 : i32
    %c0_i32_0 = arith.constant 0 : i32
    %c0_i32_1 = arith.constant 0 : i32
    return %c0_i32, %c0_i32_0 : i32, i32
  }
  func.func @transform_1(%arg0: i32, %arg1: i32) -> (i32, i32, i32) {
    %c0_i32 = arith.constant 0 : i32
    %c0_i32_0 = arith.constant 0 : i32
    return %arg0, %c0_i32, %arg1 : i32, i32, i32
  }
  func.func @transform_2(%arg0: i32, %arg1: i32) -> (i32, i32, i32) {
    %c0_i32 = arith.constant 0 : i32
    %c0_i32_0 = arith.constant 0 : i32
    return %arg0, %c0_i32, %arg1 : i32, i32, i32
  }
}

</mosaic_0001>

<llo_original>
// kernel: tpu_custom_call.1
$region0: #{tpu_custom_call.1}
  #allocation0 [shape = 'u32[]', space=smem, size = 0x4, offset = 0x4, fixed_abs, tag = 'smem constant byte address 0x4 - core index']
  #allocation1 [shape = 'u32[144,128]{1,0:T(1,128)}', space=vmem, size = 0x12000, scoped, tag = 'internal scratch']
  %s0 = inlined_call_operand.vmem [shape: bf16[144,256], index: 0, kind: input, shape index: {}]
  %s1 = inlined_call_operand.vmem [shape: bf16[2,256,144], index: 1, kind: input, shape index: {}]
  %s2 = inlined_call_operand.hbm [shape: bf16[2,144,144], index: 2, kind: output, shape index: {}]
  %s3 = sld [smem:[#allocation0]]
  $region41: #{tpu_custom_call.1} parent=0
    _
  %s5 = ssub.s32 1, %s3
  %s6 = scalar_select 0, %s5, %s3
  $region1: #{tpu_custom_call.1} parent=0
    #allocation2 [shape = 'u8[147456]{0}', space=vmem, size = 0x24000, scoped, tag = 'output window, operand 0']
    #allocation3 [shape = 's32[2]{0}', space=sflag, size = 0x8, scoped, tag = 'scoped memory for tpu_custom_call.1']
    %7 = vsyncpa [#allocation3], 0
    %s8 = scalar_lea.sflag [#allocation3], 1
    %9 = vsyncpa %s8, 0
    loop: start=0, step=1, limit=4
    $region2: #{tpu_custom_call.1} parent=1 // loop_pre_header
      _
    $region3: #{tpu_custom_call.1} parent=1 // loop_header
      %s11 = sphi 0, %s15
      %p12 = scmp.ge.s32.totalorder %s11, 4
      %s18 = sphi 0, %s30
      %s19 = sphi 0, %s26
      %s20 = sphi 0, %s18
      %s21 = sphi 0, %s19
      %s22 = sphi 0, %s20
      %s23 = sphi 0, %s21
      %s31 = sphi 0, %s31
      %s33 = sphi 0, %s31
      %s34 = sphi 0, %s33
      %s48 = sphi 0, %s34
      %s56 = sphi 0, %s58
      %s59 = sphi 0, %s56
      %s60 = sphi 0, %s59
      %s76 = sphi 0, %s60
      %s84 = sphi 0, %s86
      %s87 = sphi 0, %s84
      %s88 = sphi 0, %s87
      %s104 = sphi 0, %s88
    $region4: #{tpu_custom_call.1} parent=1 // loop_header_branch
      %14 = sbr.rel (%p12) target = $region8
    $region5: #{tpu_custom_call.1} parent=1 // loop_body
      %s16 = ssub.s32 %s11, 1
      %s17 = ssub.s32 %s11, 2
      %s24 = sadd.s32 1, %s19
      %p25 = scmp.ge.s32.totalorder %s24, 1
      %s26 = scalar_select %p25, 0, %s24
      %s27 = sadd.s32 1, %s18
      %s28 = scalar_select %p25, %s27, %s18
      %p29 = scmp.ge.s32.totalorder %s28, 2
      %s30 = scalar_select %p29, 0, %s28
      %s32 = sadd.s32 %s31, 1
      %p35 = scmp.eq.s32.totalorder %s11, 1
      %p36 = scmp.ne.s32.totalorder %s31, %s33
      %p37 = scmp.eq.s32.totalorder %s11, 0
      %p38 = por %p36, %p37
      %p39 = scmp.ne.s32.totalorder %s31, %s33
      %p40 = scmp.eq.s32.totalorder %s16, 1
      %p41 = por %p39, %p40
      %p42 = scmp.ne.s32.totalorder %s33, %s34
      %p43 = scmp.eq.s32.totalorder %s16, 0
      %p44 = por %p42, %p43
      %p45 = scmp.ne.s32.totalorder %s33, %s34
      %p46 = scmp.eq.s32.totalorder %s17, 1
      %p47 = por %p45, %p46
      %p49 = scmp.ne.s32.totalorder %s34, %s48
      %p50 = scmp.eq.s32.totalorder %s17, 0
      %p51 = por %p49, %p50
      %s52 = ssub.s32 %s18, %s30
      %s53 = ssub.s32 %s19, %s26
      %s54 = sor.u32 %s52, %s53
      %p55 = scmp.eq.s32.totalorder %s54, 0
      %s57 = sadd.s32 %s56, 1
      %s58 = scalar_select %p55, %s56, %s57
      %p61 = pneg %p55
      %p62 = scmp.eq.s32.totalorder %s11, 1
      %p63 = por %p61, %p62
      %p64 = scmp.ne.s32.totalorder %s56, %s59
      %p65 = scmp.eq.s32.totalorder %s11, 0
      %p66 = por %p64, %p65
      %p67 = scmp.ne.s32.totalorder %s56, %s59
      %p68 = scmp.eq.s32.totalorder %s16, 1
      %p69 = por %p67, %p68
      %p70 = scmp.ne.s32.totalorder %s59, %s60
      %p71 = scmp.eq.s32.totalorder %s16, 0
      %p72 = por %p70, %p71
      %p73 = scmp.ne.s32.totalorder %s59, %s60
      %p74 = scmp.eq.s32.totalorder %s17, 1
      %p75 = por %p73, %p74
      %p77 = scmp.ne.s32.totalorder %s60, %s76
      %p78 = scmp.eq.s32.totalorder %s17, 0
      %p79 = por %p77, %p78
      %s80 = ssub.s32 %s18, %s30
      %s81 = ssub.s32 %s19, %s26
      %s82 = sor.u32 %s80, %s81
      %p83 = scmp.eq.s32.totalorder %s82, 0
      %s85 = sadd.s32 %s84, 1
      %s86 = scalar_select %p83, %s84, %s85
      %p89 = pneg %p83
      %p90 = scmp.eq.s32.totalorder %s11, 1
      %p91 = por %p89, %p90
      %p92 = scmp.ne.s32.totalorder %s84, %s87
      %p93 = scmp.eq.s32.totalorder %s11, 0
      %p94 = por %p92, %p93
      %p95 = scmp.ne.s32.totalorder %s84, %s87
      %p96 = scmp.eq.s32.totalorder %s16, 1
      %p97 = por %p95, %p96
      %p98 = scmp.ne.s32.totalorder %s87, %s88
      %p99 = scmp.eq.s32.totalorder %s16, 0
      %p100 = por %p98, %p99
      %p101 = scmp.ne.s32.totalorder %s87, %s88
      %p102 = scmp.eq.s32.totalorder %s17, 1
      %p103 = por %p101, %p102
      %p105 = scmp.ne.s32.totalorder %s88, %s104
      %p106 = scmp.eq.s32.totalorder %s17, 0
      %p107 = por %p105, %p106
      %p108 = scmp.le.s32.totalorder 1, %s11
      %p109 = scmp.lt.s32.totalorder %s11, 3
      %p110 = pnand %p108, %p109
      %p111 = pneg %p110
      // Predicated region
      $region9: #{tpu_custom_call.1} parent=5 // pred_check
        _
      $region10: #{tpu_custom_call.1} parent=5 // pred_check_branch
        %113 = sbr.rel (%p110) target = $region12
      $region11: #{tpu_custom_call.1} parent=5 // pred_region
        %s114 = ssub.s32 %s11, 1
        // Predicated region
        $region13: #{tpu_custom_call.1} parent=11 // pred_check
          %p115 = pneg %p44
        $region14: #{tpu_custom_call.1} parent=11 // pred_check_branch
          %117 = sbr.rel (%p115) target = $region16
        $region15: #{tpu_custom_call.1} parent=11 // pred_region
          _
        $region16: #{tpu_custom_call.1} parent=11 // pred_fallthru
          _
      $region12: #{tpu_custom_call.1} parent=5 // pred_fallthru
        _
      %p118 = scmp.lt.s32.totalorder %s11, 2
      // Predicated region
      $region17: #{tpu_custom_call.1} parent=5 // pred_check
        %p119 = pneg %p118
      $region18: #{tpu_custom_call.1} parent=5 // pred_check_branch
        %121 = sbr.rel (%p119) target = $region20
      $region19: #{tpu_custom_call.1} parent=5 // pred_region
        // Predicated region
        $region21: #{tpu_custom_call.1} parent=19 // pred_check
          %p122 = pneg %p66
        $region22: #{tpu_custom_call.1} parent=19 // pred_check_branch
          %124 = sbr.rel (%p122) target = $region24
        $region23: #{tpu_custom_call.1} parent=19 // pred_region
          %s125 = smul.u32 2, %s19
          %p126 = scmp.lt.s32.totalorder %s18, 1
          %s127 = scalar_select %p126, %s18, 1
          %p128 = scmp.lt.s32.totalorder %s125, 1
          %s129 = scalar_select %p128, %s125, 1
          %s130 = smul.addr %s127, 64
          %s131 = sadd.s32 %s129, %s130
          %s132 = smul.addr %s131, 4
          %s133 = scalar_lea.vmem %s1, %s132
          %s134 = smul.u32 2, %s19
        $region24: #{tpu_custom_call.1} parent=19 // pred_fallthru
          _
      $region20: #{tpu_custom_call.1} parent=5 // pred_fallthru
        _
      %p135 = scmp.le.s32.totalorder 1, %s11
      %p136 = scmp.lt.s32.totalorder %s11, 3
      %p137 = pnand %p135, %p136
      %p138 = pneg %p137
      // Predicated region
      $region25: #{tpu_custom_call.1} parent=5 // pred_check
        _
      $region26: #{tpu_custom_call.1} parent=5 // pred_check_branch
        %140 = sbr.rel (%p137) target = $region28
      $region27: #{tpu_custom_call.1} parent=5 // pred_region
        %s141 = ssub.s32 %s11, 1
        %p142 = pneg %p44
        %p143 = pneg %p41
        %s144 = smul.u32 2, %s21
        %p145 = scmp.lt.s32.totalorder %s20, 1
        %s146 = scalar_select %p145, %s20, 1
        %p147 = scmp.lt.s32.totalorder %s144, 1
        %s148 = scalar_select %p147, %s144, 1
        %s149 = smul.addr %s146, 64
        %s150 = sadd.s32 %s148, %s149
        %s151 = smul.addr %s150, 4
        %s152 = scalar_lea.vmem %s1, %s151
        %p153 = pneg %p72
        %p154 = pneg %p69
        %p155 = pneg %p100
        %p156 = pneg %p97
        %s157 = sand.u32 %s87, 1
        %s158 = scalar_lea.sflag [#allocation3], %s157
        %s159 = sand.u32 %s87, 1
        %s160 = smul.addr %s159, 144
        %s161 = scalar_lea.vmem [#allocation2], %s160
        %s162 = smul.u32 2, %s21
        %p163 = scmp.lt.s32.totalorder %s20, 1
        %s164 = scalar_select %p163, %s20, 1
        %p165 = scmp.lt.s32.totalorder %s162, 1
        %s166 = scalar_select %p165, %s162, 1
        %s167 = smul.addr %s164, 64
        %s168 = sadd.s32 %s166, %s167
        %s169 = smul.addr %s168, 4
        %s170 = scalar_lea.vmem %s1, %s169
        %s171 = smul.u32 2, %s21
        %s172 = smul.u32 2, %s21
        %v173 = vld [vmem:[%s0] sm:$0xff]
        %v174 = vld [vmem:[%s0 + $0x8] sm:$0xff]
        %v175 = vld [vmem:[%s0 + $0x10] sm:$0xff]
        %v176 = vld [vmem:[%s0 + $0x18] sm:$0xff]
        %v177 = vld [vmem:[%s0 + $0x20] sm:$0xff]
        %v178 = vld [vmem:[%s0 + $0x28] sm:$0xff]
        %v179 = vld [vmem:[%s0 + $0x30] sm:$0xff]
        %v180 = vld [vmem:[%s0 + $0x38] sm:$0xff]
        %v181 = vld [vmem:[%s0 + $0x40] sm:$0xff]
        %v182 = vld [vmem:[%s0 + $0x48] sm:$0xff]
        %v183 = vld [vmem:[%s0 + $0x50] sm:$0xff]
        %v184 = vld [vmem:[%s0 + $0x58] sm:$0xff]
        %v185 = vld [vmem:[%s0 + $0x60] sm:$0xff]
        %v186 = vld [vmem:[%s0 + $0x68] sm:$0xff]
        %v187 = vld [vmem:[%s0 + $0x70] sm:$0xff]
        %v188 = vld [vmem:[%s0 + $0x78] sm:$0xff]
        %v189 = vld [vmem:[%s0 + $0x80] sm:$0xff]
        %v190 = vld [vmem:[%s0 + $0x88] sm:$0xff]
        %v191 = vld [vmem:[%s170] sm:$0xff]
        %v192 = vld [vmem:[%s170 + $0x8] sm:$0xff]
        %v193 = vld [vmem:[%s170 + $0x10] sm:$0xff]
        %v194 = vld [vmem:[%s170 + $0x18] sm:$0xff]
        %v195 = vld [vmem:[%s170 + $0x20] sm:$0xff]
        %v196 = vld [vmem:[%s170 + $0x28] sm:$0xff]
        %v197 = vld [vmem:[%s170 + $0x30] sm:$0xff]
        %v198 = vld [vmem:[%s170 + $0x38] sm:$0xff]
        %v199 = vld [vmem:[%s170 + $0x40] sm:$0xff]
        %v200 = vld [vmem:[%s170 + $0x48] sm:$0xff]
        %v201 = vld [vmem:[%s170 + $0x50] sm:$0xff]
        %v202 = vld [vmem:[%s170 + $0x58] sm:$0xff]
        %v203 = vld [vmem:[%s170 + $0x60] sm:$0xff]
        %v204 = vld [vmem:[%s170 + $0x68] sm:$0xff]
        %v205 = vld [vmem:[%s170 + $0x70] sm:$0xff]
        %v206 = vld [vmem:[%s170 + $0x78] sm:$0xff]
        %v207 = vld [vmem:[%s170 + $0x80] sm:$0xff]
        %v208 = vld [vmem:[%s170 + $0x88] sm:$0xff]
        %v209 = vld [vmem:[%s170 + $0x90] sm:$0xff]
        %v210 = vld [vmem:[%s170 + $0x98] sm:$0xff]
        %v211 = vld [vmem:[%s170 + $0xa0] sm:$0xff]
        %v212 = vld [vmem:[%s170 + $0xa8] sm:$0xff]
        %v213 = vld [vmem:[%s170 + $0xb0] sm:$0xff]
        %v214 = vld [vmem:[%s170 + $0xb8] sm:$0xff]
        %v215 = vld [vmem:[%s170 + $0xc0] sm:$0xff]
        %v216 = vld [vmem:[%s170 + $0xc8] sm:$0xff]
        %v217 = vld [vmem:[%s170 + $0xd0] sm:$0xff]
        %v218 = vld [vmem:[%s170 + $0xd8] sm:$0xff]
        %v219 = vld [vmem:[%s170 + $0xe0] sm:$0xff]
        %v220 = vld [vmem:[%s170 + $0xe8] sm:$0xff]
        %v221 = vld [vmem:[%s170 + $0xf0] sm:$0xff]
        %v222 = vld [vmem:[%s170 + $0xf8] sm:$0xff]
        %v241 = vunpack.c.l.b16 %v173
        %v242 = vunpack.c.h.b16 %v173
        %v243 = vunpack.c.l.b16 %v174
        %v244 = vunpack.c.h.b16 %v174
        %v245 = vunpack.c.l.b16 %v175
        %v246 = vunpack.c.h.b16 %v175
        %v247 = vunpack.c.l.b16 %v176
        %v248 = vunpack.c.h.b16 %v176
        %v249 = vunpack.c.l.b16 %v177
        %v250 = vunpack.c.h.b16 %v177
        %v251 = vunpack.c.l.b16 %v178
        %v252 = vunpack.c.h.b16 %v178
        %v253 = vunpack.c.l.b16 %v179
        %v254 = vunpack.c.h.b16 %v179
        %v255 = vunpack.c.l.b16 %v180
        %v256 = vunpack.c.h.b16 %v180
        %v257 = vunpack.c.l.b16 %v181
        %v258 = vunpack.c.h.b16 %v181
        %v259 = vunpack.c.l.b16 %v182
        %v260 = vunpack.c.h.b16 %v182
        %v261 = vunpack.c.l.b16 %v183
        %v262 = vunpack.c.h.b16 %v183
        %v263 = vunpack.c.l.b16 %v184
        %v264 = vunpack.c.h.b16 %v184
        %v265 = vunpack.c.l.b16 %v185
        %v266 = vunpack.c.h.b16 %v185
        %v267 = vunpack.c.l.b16 %v186
        %v268 = vunpack.c.h.b16 %v186
        %v269 = vunpack.c.l.b16 %v187
        %v270 = vunpack.c.h.b16 %v187
        %v271 = vunpack.c.l.b16 %v188
        %v272 = vunpack.c.h.b16 %v188
        %v273 = vunpack.c.l.b16 %v189
        %v274 = vunpack.c.h.b16 %v189
        %v275 = vunpack.c.l.b16 %v190
        %v276 = vunpack.c.h.b16 %v190
        %v277 = vpack.c.b16 %v243, %v241
        %v278 = vpack.c.b16 %v244, %v242
        %v279 = vpack.c.b16 %v247, %v245
        %v280 = vpack.c.b16 %v248, %v246
        %v281 = vpack.c.b16 %v251, %v249
        %v282 = vpack.c.b16 %v252, %v250
        %v283 = vpack.c.b16 %v255, %v253
        %v284 = vpack.c.b16 %v256, %v254
        %v285 = vpack.c.b16 %v259, %v257
        %v286 = vpack.c.b16 %v260, %v258
        %v287 = vpack.c.b16 %v263, %v261
        %v288 = vpack.c.b16 %v264, %v262
        %v289 = vpack.c.b16 %v267, %v265
        %v290 = vpack.c.b16 %v268, %v266
        %v291 = vpack.c.b16 %v271, %v269
        %v292 = vpack.c.b16 %v272, %v270
        %v293 = vpack.c.b16 %v275, %v273
        %v294 = vpack.c.b16 %v276, %v274
        %v345 = vunpack.c.l.b16 %v191
        %v346 = vunpack.c.h.b16 %v191
        %v347 = vunpack.c.l.b16 %v192
        %v348 = vunpack.c.h.b16 %v192
        %v349 = vunpack.c.l.b16 %v193
        %v350 = vunpack.c.h.b16 %v193
        %v351 = vunpack.c.l.b16 %v194
        %v352 = vunpack.c.h.b16 %v194
        %v353 = vunpack.c.l.b16 %v195
        %v354 = vunpack.c.h.b16 %v195
        %v355 = vunpack.c.l.b16 %v196
        %v356 = vunpack.c.h.b16 %v196
        %v357 = vunpack.c.l.b16 %v197
        %v358 = vunpack.c.h.b16 %v197
        %v359 = vunpack.c.l.b16 %v198
        %v360 = vunpack.c.h.b16 %v198
        %v361 = vunpack.c.l.b16 %v199
        %v362 = vunpack.c.h.b16 %v199
        %v363 = vunpack.c.l.b16 %v200
        %v364 = vunpack.c.h.b16 %v200
        %v365 = vunpack.c.l.b16 %v201
        %v366 = vunpack.c.h.b16 %v201
        %v367 = vunpack.c.l.b16 %v202
        %v368 = vunpack.c.h.b16 %v202
        %v369 = vunpack.c.l.b16 %v203
        %v370 = vunpack.c.h.b16 %v203
        %v371 = vunpack.c.l.b16 %v204
        %v372 = vunpack.c.h.b16 %v204
        %v373 = vunpack.c.l.b16 %v205
        %v374 = vunpack.c.h.b16 %v205
        %v375 = vunpack.c.l.b16 %v206
        %v376 = vunpack.c.h.b16 %v206
        %v377 = vunpack.c.l.b16 %v207
        %v378 = vunpack.c.h.b16 %v207
        %v379 = vunpack.c.l.b16 %v208
        %v380 = vunpack.c.h.b16 %v208
        %v381 = vunpack.c.l.b16 %v209
        %v382 = vunpack.c.h.b16 %v209
        %v383 = vunpack.c.l.b16 %v210
        %v384 = vunpack.c.h.b16 %v210
        %v385 = vunpack.c.l.b16 %v211
        %v386 = vunpack.c.h.b16 %v211
        %v387 = vunpack.c.l.b16 %v212
        %v388 = vunpack.c.h.b16 %v212
        %v389 = vunpack.c.l.b16 %v213
        %v390 = vunpack.c.h.b16 %v213
        %v391 = vunpack.c.l.b16 %v214
        %v392 = vunpack.c.h.b16 %v214
        %v393 = vunpack.c.l.b16 %v215
        %v394 = vunpack.c.h.b16 %v215
        %v395 = vunpack.c.l.b16 %v216
        %v396 = vunpack.c.h.b16 %v216
        %v397 = vunpack.c.l.b16 %v217
        %v398 = vunpack.c.h.b16 %v217
        %v399 = vunpack.c.l.b16 %v218
        %v400 = vunpack.c.h.b16 %v218
        %v401 = vunpack.c.l.b16 %v219
        %v402 = vunpack.c.h.b16 %v219
        %v403 = vunpack.c.l.b16 %v220
        %v404 = vunpack.c.h.b16 %v220
        %v405 = vunpack.c.l.b16 %v221
        %v406 = vunpack.c.h.b16 %v221
        %v407 = vunpack.c.l.b16 %v222
        %v408 = vunpack.c.h.b16 %v222
        %v409 = vpack.c.b16 %v347, %v345
        %v410 = vpack.c.b16 %v348, %v346
        %v411 = vpack.c.b16 %v351, %v349
        %v412 = vpack.c.b16 %v352, %v350
        %v413 = vpack.c.b16 %v355, %v353
        %v414 = vpack.c.b16 %v356, %v354
        %v415 = vpack.c.b16 %v359, %v357
        %v416 = vpack.c.b16 %v360, %v358
        %v417 = vpack.c.b16 %v363, %v361
        %v418 = vpack.c.b16 %v364, %v362
        %v419 = vpack.c.b16 %v367, %v365
        %v420 = vpack.c.b16 %v368, %v366
        %v421 = vpack.c.b16 %v371, %v369
        %v422 = vpack.c.b16 %v372, %v370
        %v423 = vpack.c.b16 %v375, %v373
        %v424 = vpack.c.b16 %v376, %v374
        %v425 = vpack.c.b16 %v379, %v377
        %v426 = vpack.c.b16 %v380, %v378
        %v427 = vpack.c.b16 %v383, %v381
        %v428 = vpack.c.b16 %v384, %v382
        %v429 = vpack.c.b16 %v387, %v385
        %v430 = vpack.c.b16 %v388, %v386
        %v431 = vpack.c.b16 %v391, %v389
        %v432 = vpack.c.b16 %v392, %v390
        %v433 = vpack.c.b16 %v395, %v393
        %v434 = vpack.c.b16 %v396, %v394
        %v435 = vpack.c.b16 %v399, %v397
        %v436 = vpack.c.b16 %v400, %v398
        %v437 = vpack.c.b16 %v403, %v401
        %v438 = vpack.c.b16 %v404, %v402
        %v439 = vpack.c.b16 %v407, %v405
        %v440 = vpack.c.b16 %v408, %v406
        %473 = vmatprep.subr.bf16.mxu0 %v410
        %474 = vmatpush1.bf16.msra.mxu0 %v409
        %475 = vmatprep.subr.bf16.mxu0 %v412
        %476 = vmatpush1.bf16.msra.mxu0 %v411
        %477 = vmatprep.subr.bf16.mxu0 %v414
        %478 = vmatpush1.bf16.msra.mxu0 %v413
        %479 = vmatprep.subr.bf16.mxu0 %v416
        %480 = vmatpush1.bf16.msra.mxu0 %v415
        %481 = vmatprep.subr.bf16.mxu0 %v418
        %482 = vmatpush1.bf16.msra.mxu0 %v417
        %483 = vmatprep.subr.bf16.mxu0 %v420
        %484 = vmatpush1.bf16.msra.mxu0 %v419
        %485 = vmatprep.subr.bf16.mxu0 %v422
        %486 = vmatpush1.bf16.msra.mxu0 %v421
        %487 = vmatprep.subr.bf16.mxu0 %v424
        %488 = vmatpush1.bf16.msra.mxu0 %v423
        %489 = vmatprep.subr.bf16.mxu0 %v426
        %490 = vmatpush1.bf16.msra.mxu0 %v425
        %491 = vmatprep.subr.bf16.mxu0 %v428
        %492 = vmatpush1.bf16.msra.mxu0 %v427
        %493 = vmatprep.subr.bf16.mxu0 %v430
        %494 = vmatpush1.bf16.msra.mxu0 %v429
        %495 = vmatprep.subr.bf16.mxu0 %v432
        %496 = vmatpush1.bf16.msra.mxu0 %v431
        %497 = vmatprep.subr.bf16.mxu0 %v434
        %498 = vmatpush1.bf16.msra.mxu0 %v433
        %499 = vmatprep.subr.bf16.mxu0 %v436
        %500 = vmatpush1.bf16.msra.mxu0 %v435
        %501 = vmatprep.subr.bf16.mxu0 %v438
        %502 = vmatpush1.bf16.msra.mxu0 %v437
        %503 = vmatprep.subr.bf16.mxu0 %v440
        %504 = vmatpush1.bf16.msra.mxu0 %v439
        %505 = vmatprep.mubr.bf16.mxu0 %v278
        %506 = vmatmul.mubr.bf16.gmra.mrb[0].mxu0 %v277
        %v507 = vpop.f32.mrb[0].mxu0
        %v508 = vadd.f32 0.0, %v507
        %v509 = vpop.f32.mrb[0].mxu0
        %v510 = vadd.f32 0.0, %v509
        %v511 = vpop.f32.mrb[0].mxu0
        %v512 = vadd.f32 0.0, %v511
        %v513 = vpop.f32.mrb[0].mxu0
        %v514 = vadd.f32 0.0, %v513
        %515 = vmatprep.mubr.bf16.mxu0 %v280
        %516 = vmatmul.mubr.bf16.gmra.mrb[0].mxu0 %v279
        %v517 = vpop.f32.mrb[0].mxu0
        %v518 = vadd.f32 0.0, %v517
        %v519 = vpop.f32.mrb[0].mxu0
        %v520 = vadd.f32 0.0, %v519
        %v521 = vpop.f32.mrb[0].mxu0
        %v522 = vadd.f32 0.0, %v521
        %v523 = vpop.f32.mrb[0].mxu0
        %v524 = vadd.f32 0.0, %v523
        %525 = vmatprep.mubr.bf16.mxu0 %v282
        %526 = vmatmul.mubr.bf16.gmra.mrb[0].mxu0 %v281
        %v527 = vpop.f32.mrb[0].mxu0
        %v528 = vadd.f32 0.0, %v527
        %v529 = vpop.f32.mrb[0].mxu0
        %v530 = vadd.f32 0.0, %v529
        %v531 = vpop.f32.mrb[0].mxu0
        %v532 = vadd.f32 0.0, %v531
        %v533 = vpop.f32.mrb[0].mxu0
        %v534 = vadd.f32 0.0, %v533
        %535 = vmatprep.mubr.bf16.mxu0 %v284
        %536 = vmatmul.mubr.bf16.gmra.mrb[0].mxu0 %v283
        %v537 = vpop.f32.mrb[0].mxu0
        %v538 = vadd.f32 0.0, %v537
        %v539 = vpop.f32.mrb[0].mxu0
        %v540 = vadd.f32 0.0, %v539
        %v541 = vpop.f32.mrb[0].mxu0
        %v542 = vadd.f32 0.0, %v541
        %v543 = vpop.f32.mrb[0].mxu0
        %v544 = vadd.f32 0.0, %v543
        %545 = vmatprep.mubr.bf16.mxu0 %v286
        %546 = vmatmul.mubr.bf16.gmra.mrb[0].mxu0 %v285
        %v547 = vpop.f32.mrb[0].mxu0
        %v548 = vadd.f32 0.0, %v547
        %v549 = vpop.f32.mrb[0].mxu0
        %v550 = vadd.f32 0.0, %v549
        %v551 = vpop.f32.mrb[0].mxu0
        %v552 = vadd.f32 0.0, %v551
        %v553 = vpop.f32.mrb[0].mxu0
        %v554 = vadd.f32 0.0, %v553
        %555 = vmatprep.mubr.bf16.mxu0 %v288
        %556 = vmatmul.mubr.bf16.gmra.mrb[0].mxu0 %v287
        %v557 = vpop.f32.mrb[0].mxu0
        %v558 = vadd.f32 0.0, %v557
        %v559 = vpop.f32.mrb[0].mxu0
        %v560 = vadd.f32 0.0, %v559
        %v561 = vpop.f32.mrb[0].mxu0
        %v562 = vadd.f32 0.0, %v561
        %v563 = vpop.f32.mrb[0].mxu0
        %v564 = vadd.f32 0.0, %v563
        %565 = vmatprep.mubr.bf16.mxu0 %v290
        %566 = vmatmul.mubr.bf16.gmra.mrb[0].mxu0 %v289
        %v567 = vpop.f32.mrb[0].mxu0
        %v568 = vadd.f32 0.0, %v567
        %v569 = vpop.f32.mrb[0].mxu0
        %v570 = vadd.f32 0.0, %v569
        %v571 = vpop.f32.mrb[0].mxu0
        %v572 = vadd.f32 0.0, %v571
        %v573 = vpop.f32.mrb[0].mxu0
        %v574 = vadd.f32 0.0, %v573
        %575 = vmatprep.mubr.bf16.mxu0 %v292
        %576 = vmatmul.mubr.bf16.gmra.mrb[0].mxu0 %v291
        %v577 = vpop.f32.mrb[0].mxu0
        %v578 = vadd.f32 0.0, %v577
        %v579 = vpop.f32.mrb[0].mxu0
        %v580 = vadd.f32 0.0, %v579
        %v581 = vpop.f32.mrb[0].mxu0
        %v582 = vadd.f32 0.0, %v581
        %v583 = vpop.f32.mrb[0].mxu0
        %v584 = vadd.f32 0.0, %v583
        %585 = vmatprep.mubr.bf16.mxu0 %v294
        %586 = vmatmul.mubr.bf16.gmra.mrb[0].mxu0 %v293
        %v587 = vpop.f32.mrb[0].mxu0
        %v588 = vadd.f32 0.0, %v587
        %v589 = vpop.f32.mrb[0].mxu0
        %v590 = vadd.f32 0.0, %v589
        %v591 = vpop.f32.mrb[0].mxu0
        %v592 = vadd.f32 0.0, %v591
        %v593 = vpop.f32.mrb[0].mxu0
        %v594 = vadd.f32 0.0, %v593
        %595 = vdwg.mxu0
        %v596 = vpack.c.bf16 %v512, %v508
        %v597 = vpack.c.bf16 %v514, %v510
        %v598 = vpack.c.bf16 %v522, %v518
        %v599 = vpack.c.bf16 %v524, %v520
        %v600 = vpack.c.bf16 %v532, %v528
        %v601 = vpack.c.bf16 %v534, %v530
        %v602 = vpack.c.bf16 %v542, %v538
        %v603 = vpack.c.bf16 %v544, %v540
        %v604 = vpack.c.bf16 %v552, %v548
        %v605 = vpack.c.bf16 %v554, %v550
        %v606 = vpack.c.bf16 %v562, %v558
        %v607 = vpack.c.bf16 %v564, %v560
        %v608 = vpack.c.bf16 %v572, %v568
        %v609 = vpack.c.bf16 %v574, %v570
        %v610 = vpack.c.bf16 %v582, %v578
        %v611 = vpack.c.bf16 %v584, %v580
        %v612 = vpack.c.bf16 %v592, %v588
        %v613 = vpack.c.bf16 %v594, %v590
        %v632 = vunpack.c.l.b16 %v596
        %v633 = vunpack.c.l.b16 %v597
        %v634 = vunpack.c.h.b16 %v596
        %v635 = vunpack.c.h.b16 %v597
        %v636 = vunpack.c.l.b16 %v598
        %v637 = vunpack.c.l.b16 %v599
        %v638 = vunpack.c.h.b16 %v598
        %v639 = vunpack.c.h.b16 %v599
        %v640 = vunpack.c.l.b16 %v600
        %v641 = vunpack.c.l.b16 %v601
        %v642 = vunpack.c.h.b16 %v600
        %v643 = vunpack.c.h.b16 %v601
        %v644 = vunpack.c.l.b16 %v602
        %v645 = vunpack.c.l.b16 %v603
        %v646 = vunpack.c.h.b16 %v602
        %v647 = vunpack.c.h.b16 %v603
        %v648 = vunpack.c.l.b16 %v604
        %v649 = vunpack.c.l.b16 %v605
        %v650 = vunpack.c.h.b16 %v604
        %v651 = vunpack.c.h.b16 %v605
        %v652 = vunpack.c.l.b16 %v606
        %v653 = vunpack.c.l.b16 %v607
        %v654 = vunpack.c.h.b16 %v606
        %v655 = vunpack.c.h.b16 %v607
        %v656 = vunpack.c.l.b16 %v608
        %v657 = vunpack.c.l.b16 %v609
        %v658 = vunpack.c.h.b16 %v608
        %v659 = vunpack.c.h.b16 %v609
        %v660 = vunpack.c.l.b16 %v610
        %v661 = vunpack.c.l.b16 %v611
        %v662 = vunpack.c.h.b16 %v610
        %v663 = vunpack.c.h.b16 %v611
        %v664 = vunpack.c.l.b16 %v612
        %v665 = vunpack.c.l.b16 %v613
        %v666 = vunpack.c.h.b16 %v612
        %v667 = vunpack.c.h.b16 %v613
        %v668 = vpack.c.b16 %v633, %v632
        %v669 = vpack.c.b16 %v635, %v634
        %v670 = vpack.c.b16 %v637, %v636
        %v671 = vpack.c.b16 %v639, %v638
        %v672 = vpack.c.b16 %v641, %v640
        %v673 = vpack.c.b16 %v643, %v642
        %v674 = vpack.c.b16 %v645, %v644
        %v675 = vpack.c.b16 %v647, %v646
        %v676 = vpack.c.b16 %v649, %v648
        %v677 = vpack.c.b16 %v651, %v650
        %v678 = vpack.c.b16 %v653, %v652
        %v679 = vpack.c.b16 %v655, %v654
        %v680 = vpack.c.b16 %v657, %v656
        %v681 = vpack.c.b16 %v659, %v658
        %v682 = vpack.c.b16 %v661, %v660
        %v683 = vpack.c.b16 %v663, %v662
        %v684 = vpack.c.b16 %v665, %v664
        %v685 = vpack.c.b16 %v667, %v666
        %vm704 = vcmask 1043456
        %vm705 = vcmask 130052
        %vm706 = vmor %vm705, %vm704
        %707 = vst.msk [vmem:[%s161] sm:$0xff] %vm706, %v668
        %708 = vst.msk [vmem:[%s161 + $0x8] sm:$0xff] %vm706, %v669
        %709 = vst.msk [vmem:[%s161 + $0x10] sm:$0xff] %vm706, %v670
        %710 = vst.msk [vmem:[%s161 + $0x18] sm:$0xff] %vm706, %v671
        %711 = vst.msk [vmem:[%s161 + $0x20] sm:$0xff] %vm706, %v672
        %712 = vst.msk [vmem:[%s161 + $0x28] sm:$0xff] %vm706, %v673
        %713 = vst.msk [vmem:[%s161 + $0x30] sm:$0xff] %vm706, %v674
        %714 = vst.msk [vmem:[%s161 + $0x38] sm:$0xff] %vm706, %v675
        %715 = vst.msk [vmem:[%s161 + $0x40] sm:$0xff] %vm706, %v676
        %716 = vst.msk [vmem:[%s161 + $0x48] sm:$0xff] %vm706, %v677
        %717 = vst.msk [vmem:[%s161 + $0x50] sm:$0xff] %vm706, %v678
        %718 = vst.msk [vmem:[%s161 + $0x58] sm:$0xff] %vm706, %v679
        %719 = vst.msk [vmem:[%s161 + $0x60] sm:$0xff] %vm706, %v680
        %720 = vst.msk [vmem:[%s161 + $0x68] sm:$0xff] %vm706, %v681
        %721 = vst.msk [vmem:[%s161 + $0x70] sm:$0xff] %vm706, %v682
        %722 = vst.msk [vmem:[%s161 + $0x78] sm:$0xff] %vm706, %v683
        %723 = vst.msk [vmem:[%s161 + $0x80] sm:$0xff] %vm706, %v684
        %724 = vst.msk [vmem:[%s161 + $0x88] sm:$0xff] %vm706, %v685
        %s725 = sand.u32 %s87, 1
        %s726 = scalar_lea.sflag [#allocation3], %s725
        %s727 = sand.u32 %s87, 1
        %s728 = smul.addr %s727, 144
        %s729 = scalar_lea.vmem [#allocation2], %s728
        // Predicated region
        $region29: #{tpu_custom_call.1} parent=27 // pred_check
          %p730 = pneg %p97
        $region30: #{tpu_custom_call.1} parent=27 // pred_check_branch
          %732 = sbr.rel (%p730) target = $region32
        $region31: #{tpu_custom_call.1} parent=27 // pred_region
          %s733 = smul.u32 2, %s21
          %s735 = ssub.s32 2304, 2304
          %736 = vsyncadd %s726, %s735
          %s737 = smul.addr %s20, 36
          %s738 = sadd.s32 %s733, %s737
          %s739 = smul.addr %s738, 64
          %s740 = scalar_lea.hbm %s2, %s739
          %s741 = sshll.u32 %s729, 4
          %s742 = int_to_ptr.vmem [resolvable:$true] %s741
          %747 = dma.vmem_to_hbm [thread:$0]  %s742, 2304, %s740, %s726, 128, 128, 8
        $region32: #{tpu_custom_call.1} parent=27 // pred_fallthru
          _
      $region28: #{tpu_custom_call.1} parent=5 // pred_fallthru
        _
      %p748 = scmp.le.s32.totalorder 2, %s11
      // Predicated region
      $region33: #{tpu_custom_call.1} parent=5 // pred_check
        %p749 = pneg %p748
      $region34: #{tpu_custom_call.1} parent=5 // pred_check_branch
        %751 = sbr.rel (%p749) target = $region36
      $region35: #{tpu_custom_call.1} parent=5 // pred_region
        %s752 = ssub.s32 %s11, 2
        // Predicated region
        $region37: #{tpu_custom_call.1} parent=35 // pred_check
          %p753 = pneg %p103
        $region38: #{tpu_custom_call.1} parent=35 // pred_check_branch
          %755 = sbr.rel (%p753) target = $region40
        $region39: #{tpu_custom_call.1} parent=35 // pred_region
          %s756 = sand.u32 %s88, 1
          %s757 = scalar_lea.sflag [#allocation3], %s756
          %s758 = sand.u32 %s88, 1
          %s759 = smul.addr %s758, 144
          %s760 = scalar_lea.vmem [#allocation2], %s759
          %761 = dma.done %s757, 2304
        $region40: #{tpu_custom_call.1} parent=35 // pred_fallthru
          _
      $region36: #{tpu_custom_call.1} parent=5 // pred_fallthru
        _
    $region6: #{tpu_custom_call.1} parent=1 // loop_footer
      %s15 = sadd.s32 1, %s11
    $region7: #{tpu_custom_call.1} parent=1 // loop_footer_branch
      %10 = sbr.rel target = $region3
    $region8: #{tpu_custom_call.1} parent=1 // loop_exit
      _
    %762 = vsyncpa [#allocation3], 1
    %s763 = scalar_lea.sflag [#allocation3], 1
    %764 = vsyncpa %s763, 1

</llo_original>
